<compile_context>
chip_gen: v7x
topology: tpu7x:2x2x1
jax: 0.10.0
libtpu: 0.0.40
codegen_flags: <defaults>
</compile_context>

<pallas_src>
import jax
import jax.numpy as jnp
from jax.experimental import pallas as pl
from jax.experimental.pallas import tpu as pltpu


# ---------------------------------------------------------------------------
# Kernels
# ---------------------------------------------------------------------------

def _modulation_fused_kernel(y_ref, w_ref, b_ref, o_ref):
    """Single-step path: full W resident in VMEM, SiLU computed exactly once."""
    n, _, dim = o_ref.shape
    y = y_ref[...].astype(jnp.float32)
    h = (y * jax.nn.sigmoid(y)).astype(w_ref.dtype)                 # SiLU (VPU/EUP)
    z = jnp.dot(h, w_ref[...], preferred_element_type=jnp.float32)  # MXU
    z = z + b_ref[...]
    for i in range(n):  # static unroll; each store is a lane-aligned (B, dim) slab
        o_ref[i, :, :] = z[:, i * dim:(i + 1) * dim].astype(o_ref.dtype)


def _modulation_tiled_kernel(y_ref, w_ref, b_ref, o_ref):
    """Streaming path: one (dim, tn) lane tile of W per grid step.

    The SiLU recompute is B*dim of VPU/EUP work per step, fully hidden under the
    multi-MiB W DMA (the kernel is HBM-bandwidth bound on W bytes).
    """
    y = y_ref[...].astype(jnp.float32)
    h = (y * jax.nn.sigmoid(y)).astype(w_ref.dtype)
    acc = jnp.dot(h, w_ref[...], preferred_element_type=jnp.float32)  # MXU
    o_ref[...] = (acc + b_ref[...]).astype(o_ref.dtype)


# ---------------------------------------------------------------------------
# Sizing helpers
# ---------------------------------------------------------------------------

def _vmem_capacity_bytes():
    """Physical per-core VMEM, generation-aware (v5e/v6e: 128 MiB, v7x: 64 MiB)."""
    try:
        cap = getattr(pltpu.get_tpu_info(), "vmem_capacity_bytes", None)
        if cap:
            return int(cap)
    except Exception:
        pass
    return 64 << 20  # conservative fallback (v7x per-TensorCore VMEM)


def _choose_tn(dim, n, w_itemsize, vmem_cap):
    """Largest lane tile (multiple of 128 dividing dim) whose double-buffered W
    stream fits the per-generation VMEM budget, nudged so the grid length is
    even (v7x megacore load balance) when possible."""
    assert dim % 128 == 0
    w_budget = min(vmem_cap // 4, 24 << 20)  # 16 MiB on v7x, 24 MiB on v5e/v6e
    by_budget = max(128, (w_budget // (2 * dim * w_itemsize)) // 128 * 128)
    tn = min(dim, 2048, by_budget)
    while dim % tn != 0:
        tn -= 128
    # v7x megacore: prefer an even number of grid steps when there is >1 step.
    grid_len = n * (dim // tn)
    if grid_len > 1 and grid_len % 2 == 1:
        t = tn - 128
        while t >= 128:
            if dim % t == 0 and (n * (dim // t)) % 2 == 0:
                tn = t
                break
            t -= 128
    return tn


# ---------------------------------------------------------------------------
# Forward wrappers
# ---------------------------------------------------------------------------

def modulation_forward_stacked(y, w_t, b, n, *, max_single_step_bytes=(4 << 20)):
    """y: (B, dim), w_t: (dim, n*dim) [bf16 recommended], b: (n*dim,).

    Returns a single stacked array of shape (n, B, 1, dim) — chunk i of the
    PyTorch module is out[i].
    """
    B, dim = y.shape
    out_dim = n * dim
    assert w_t.shape == (dim, out_dim) and b.shape == (out_dim,)

    w_isz = jnp.dtype(w_t.dtype).itemsize
    y_isz = jnp.dtype(y.dtype).itemsize
    vmem_cap = _vmem_capacity_bytes()
    vmem_limit = int(min((vmem_cap * 3) // 4, 100 << 20))

    b2d = b.reshape(1, out_dim).astype(jnp.float32)

    def cost(grid_len):
        return pl.CostEstimate(
            flops=2 * B * dim * out_dim,
            transcendentals=B * dim * grid_len,
            bytes_accessed=(dim * out_dim * w_isz + out_dim * 4
                            + B * dim * y_isz + n * B * dim * y_isz),
        )

    # Rough resident-set size of the grid-collapsed (single-step) variant.
    single_bytes = (dim * out_dim * w_isz      # W (single buffer)
                    + out_dim * 4              # bias
                    + B * dim * y_isz          # y
                    + 2 * B * out_dim * 4)     # f32 z + output

    use_single = (single_bytes <= max_single_step_bytes) or (dim % 128 != 0)
    if dim % 128 != 0 and single_bytes > (vmem_cap * 3) // 4:
        # TODO(synk): pad dim / W / b up to a multiple of 128 to enable the tiled path.
        raise ValueError("dim not a multiple of 128 and W does not fit VMEM")

    if use_single:
        out = pl.pallas_call(
            _modulation_fused_kernel,
            out_shape=jax.ShapeDtypeStruct((n, B, dim), y.dtype),
            grid=(1,),
            in_specs=[
                pl.BlockSpec((B, dim), lambda i: (0, 0)),
                pl.BlockSpec((dim, out_dim), lambda i: (0, 0)),
                pl.BlockSpec((1, out_dim), lambda i: (0, 0)),
            ],
            out_specs=pl.BlockSpec((n, B, dim), lambda i: (0, 0, 0)),
            compiler_params=pltpu.CompilerParams(
                dimension_semantics=("arbitrary",),
                vmem_limit_bytes=vmem_limit,
            ),
            cost_estimate=cost(1),
        )(y, w_t, b2d)
        return out[:, :, None, :]

    # Tiled streaming path (large dims): grid over (chunk, lane-tile).
    tn = _choose_tn(dim, n, w_isz, vmem_cap)
    tiles_per_chunk = dim // tn
    grid_len = n * tiles_per_chunk

    out = pl.pallas_call(
        _modulation_tiled_kernel,
        out_shape=jax.ShapeDtypeStruct((n, B, dim), y.dtype),
        grid=(grid_len,),
        in_specs=[
            # y: one small block, reused every grid step.
            pl.BlockSpec((B, dim), lambda j: (0, 0)),
            # W: stream (dim, tn) lane tiles; double-buffered by the pipeline.
            pl.BlockSpec((dim, tn), lambda j: (0, j)),
            # bias: matching (1, tn) lane tile.
            pl.BlockSpec((1, tn), lambda j: (0, j)),
        ],
        # Each step writes a disjoint, lane-dense (B, tn) slab of chunk
        # j // tiles_per_chunk -> output already laid out as (n, B, dim).
        out_specs=pl.BlockSpec(
            (None, B, tn),
            lambda j: (j // tiles_per_chunk, 0, j % tiles_per_chunk),
        ),
        compiler_params=pltpu.CompilerParams(
            dimension_semantics=("parallel",),
            vmem_limit_bytes=vmem_limit,
        ),
        cost_estimate=cost(grid_len),
    )(y, w_t, b2d)
    return out[:, :, None, :]


def modulation_forward(y, w_t, b, n, **kw):
    """PyTorch-identical return type: list of n arrays of shape (B, 1, dim)."""
    out = modulation_forward_stacked(y, w_t, b, n, **kw)  # (n, B, 1, dim)
    return [out[i] for i in range(n)]


# ---------------------------------------------------------------------------
# Reference + demo
# ---------------------------------------------------------------------------

def _reference(y, w_t, b, n):
    yf = y.astype(jnp.float32)
    h = yf * jax.nn.sigmoid(yf)
    z = h @ w_t.astype(jnp.float32) + b.astype(jnp.float32)
    return [c[:, None, :].astype(y.dtype) for c in jnp.split(z, n, axis=1)]


if __name__ == "__main__":
    B, dim, n = 8, 128, 4

    key = jax.random.PRNGKey(0)
    k_y, k_w, k_b = jax.random.split(key, 3)
    y = jax.random.normal(k_y, (B, dim), dtype=jnp.float32)
    # PyTorch stores W as (n*dim, dim); we keep the transposed (dim, n*dim)
    # layout in bf16 so the MXU consumes it directly (loader must transpose).
    w_t = (jax.random.normal(k_w, (dim, n * dim), dtype=jnp.float32) * 0.02
           ).astype(jnp.bfloat16)
    b = jax.random.normal(k_b, (n * dim,), dtype=jnp.float32) * 0.02

    refs = _reference(y, w_t, b, n)

    # --- Path 1: grid-collapsed single-step kernel (default at this size) ---
    outs = modulation_forward(y, w_t, b, n)
    outs = [jax.block_until_ready(o) for o in outs]
    for o, r in zip(outs, refs):
        assert o.shape == (B, 1, dim)
        assert jnp.allclose(o, r, atol=1e-2, rtol=1e-2), float(
            jnp.max(jnp.abs(o - r)))

    # --- Path 2: tiled streaming kernel (forced, to exercise the large-dim path) ---
    outs_t = modulation_forward(y, w_t, b, n, max_single_step_bytes=0)
    outs_t = [jax.block_until_ready(o) for o in outs_t]
    for o, r in zip(outs_t, refs):
        assert o.shape == (B, 1, dim)
        assert jnp.allclose(o, r, atol=1e-2, rtol=1e-2), float(
            jnp.max(jnp.abs(o - r)))

    # Spec fidelity: with the PyTorch default zero init, output is all zeros.
    zero_out = modulation_forward_stacked(
        y, jnp.zeros_like(w_t), jnp.zeros_like(b), n)
    zero_out = jax.block_until_ready(zero_out)
    assert zero_out.shape == (n, B, 1, dim)
    assert jnp.all(zero_out == 0)

    print("KERNEL_OK")
</pallas_src>

<mosaic_0001>
module attributes {stable_mosaic.version = 11 : i64} {
  func.func @_modulation_fused_kernel(%arg0: i32, %arg1: memref<8x128xf32, #tpu.memory_space<vmem>>, %arg2: memref<128x512xbf16, #tpu.memory_space<vmem>>, %arg3: memref<1x512xf32, #tpu.memory_space<vmem>>, %arg4: memref<4x8x128xf32, #tpu.memory_space<vmem>>) attributes {dimension_semantics = [#tpu.dimension_semantics<arbitrary>], iteration_bounds = array<i64: 1>, scalar_prefetch = 0 : i64, scratch_operands = 0 : i64, tpu.core_type = #tpu.core_type<tc>, window_params = [{pipeline_mode = #tpu.pipeline_mode<synchronous>, transform_indices = @transform_0, window_bounds = array<i64: 8, 128>}, {pipeline_mode = #tpu.pipeline_mode<synchronous>, transform_indices = @transform_1, window_bounds = array<i64: 128, 512>}, {pipeline_mode = #tpu.pipeline_mode<synchronous>, transform_indices = @transform_2, window_bounds = array<i64: 1, 512>}, {pipeline_mode = #tpu.pipeline_mode<synchronous>, transform_indices = @transform_3, window_bounds = array<i64: 4, 8, 128>}]} {
    %c0 = arith.constant 0 : index
    %c0_0 = arith.constant 0 : index
    %0 = vector.load %arg1[%c0, %c0_0] : memref<8x128xf32, #tpu.memory_space<vmem>>, vector<8x128xf32>
    %1 = arith.negf %0 : vector<8x128xf32>
    %2 = math.exp %1 : vector<8x128xf32>
    %cst = arith.constant 1.000000e+00 : f32
    %3 = vector.broadcast %cst : f32 to vector<8x128xf32>
    %4 = arith.addf %3, %2 : vector<8x128xf32>
    %5 = arith.divf %3, %4 : vector<8x128xf32>
    %6 = arith.mulf %0, %5 : vector<8x128xf32>
    %7 = arith.truncf %6 : vector<8x128xf32> to vector<8x128xbf16>
    %c0_1 = arith.constant 0 : index
    %c0_2 = arith.constant 0 : index
    %8 = vector.load %arg2[%c0_1, %c0_2] : memref<128x512xbf16, #tpu.memory_space<vmem>>, vector<128x512xbf16>
    %cst_3 = arith.constant dense<0.000000e+00> : vector<8x512xf32>
    %9 = tpu.matmul %7, %8, %cst_3 {dimension_numbers = #tpu.dot_dimension_numbers<[1], [0], [0], [1], [0, 0, 1, 1], [], []>} : vector<8x128xbf16>, vector<128x512xbf16>, vector<8x512xf32> -> vector<8x512xf32>
    %c0_4 = arith.constant 0 : index
    %c0_5 = arith.constant 0 : index
    %10 = vector.load %arg3[%c0_4, %c0_5] : memref<1x512xf32, #tpu.memory_space<vmem>>, vector<1x512xf32>
    %11 = vector.broadcast %10 : vector<1x512xf32> to vector<8x512xf32>
    %12 = arith.addf %9, %11 : vector<8x512xf32>
    %13 = vector.extract_strided_slice %12 {offsets = [0, 0], sizes = [8, 128], strides = [1, 1]} : vector<8x512xf32> to vector<8x128xf32>
    %c0_6 = arith.constant 0 : index
    %c0_7 = arith.constant 0 : index
    %c0_8 = arith.constant 0 : index
    %14 = vector.load %arg4[%c0_6, %c0_7, %c0_8] : memref<4x8x128xf32, #tpu.memory_space<vmem>>, vector<1x8x128xf32>
    %15 = vector.shape_cast %14 : vector<1x8x128xf32> to vector<8x128xf32>
    %16 = vector.shape_cast %13 : vector<8x128xf32> to vector<1x8x128xf32>
    tpu.vector_store %arg4[%c0_6, %c0_7, %c0_8], %16 {strides = array<i32>} : memref<4x8x128xf32, #tpu.memory_space<vmem>>, vector<1x8x128xf32>,
    %17 = vector.extract_strided_slice %12 {offsets = [0, 128], sizes = [8, 128], strides = [1, 1]} : vector<8x512xf32> to vector<8x128xf32>
    %c1 = arith.constant 1 : index
    %c0_9 = arith.constant 0 : index
    %c0_10 = arith.constant 0 : index
    %18 = vector.load %arg4[%c1, %c0_9, %c0_10] : memref<4x8x128xf32, #tpu.memory_space<vmem>>, vector<1x8x128xf32>
    %19 = vector.shape_cast %18 : vector<1x8x128xf32> to vector<8x128xf32>
    %20 = vector.shape_cast %17 : vector<8x128xf32> to vector<1x8x128xf32>
    tpu.vector_store %arg4[%c1, %c0_9, %c0_10], %20 {strides = array<i32>} : memref<4x8x128xf32, #tpu.memory_space<vmem>>, vector<1x8x128xf32>,
    %21 = vector.extract_strided_slice %12 {offsets = [0, 256], sizes = [8, 128], strides = [1, 1]} : vector<8x512xf32> to vector<8x128xf32>
    %c2 = arith.constant 2 : index
    %c0_11 = arith.constant 0 : index
    %c0_12 = arith.constant 0 : index
    %22 = vector.load %arg4[%c2, %c0_11, %c0_12] : memref<4x8x128xf32, #tpu.memory_space<vmem>>, vector<1x8x128xf32>
    %23 = vector.shape_cast %22 : vector<1x8x128xf32> to vector<8x128xf32>
    %24 = vector.shape_cast %21 : vector<8x128xf32> to vector<1x8x128xf32>
    tpu.vector_store %arg4[%c2, %c0_11, %c0_12], %24 {strides = array<i32>} : memref<4x8x128xf32, #tpu.memory_space<vmem>>, vector<1x8x128xf32>,
    %25 = vector.extract_strided_slice %12 {offsets = [0, 384], sizes = [8, 128], strides = [1, 1]} : vector<8x512xf32> to vector<8x128xf32>
    %c3 = arith.constant 3 : index
    %c0_13 = arith.constant 0 : index
    %c0_14 = arith.constant 0 : index
    %26 = vector.load %arg4[%c3, %c0_13, %c0_14] : memref<4x8x128xf32, #tpu.memory_space<vmem>>, vector<1x8x128xf32>
    %27 = vector.shape_cast %26 : vector<1x8x128xf32> to vector<8x128xf32>
    %28 = vector.shape_cast %25 : vector<8x128xf32> to vector<1x8x128xf32>
    tpu.vector_store %arg4[%c3, %c0_13, %c0_14], %28 {strides = array<i32>} : memref<4x8x128xf32, #tpu.memory_space<vmem>>, vector<1x8x128xf32>,
    return
  }
  func.func @transform_0(%arg0: i32) -> (i32, i32) {
    %c0_i32 = arith.constant 0 : i32
    %c0_i32_0 = arith.constant 0 : i32
    %c0_i32_1 = arith.constant 0 : i32
    return %c0_i32, %c0_i32_0 : i32, i32
  }
  func.func @transform_1(%arg0: i32) -> (i32, i32) {
    %c0_i32 = arith.constant 0 : i32
    %c0_i32_0 = arith.constant 0 : i32
    %c0_i32_1 = arith.constant 0 : i32
    return %c0_i32, %c0_i32_0 : i32, i32
  }
  func.func @transform_2(%arg0: i32) -> (i32, i32) {
    %c0_i32 = arith.constant 0 : i32
    %c0_i32_0 = arith.constant 0 : i32
    %c0_i32_1 = arith.constant 0 : i32
    return %c0_i32, %c0_i32_0 : i32, i32
  }
  func.func @transform_3(%arg0: i32) -> (i32, i32, i32) {
    %c0_i32 = arith.constant 0 : i32
    %c0_i32_0 = arith.constant 0 : i32
    %c0_i32_1 = arith.constant 0 : i32
    %c0_i32_2 = arith.constant 0 : i32
    return %c0_i32, %c0_i32_0, %c0_i32_1 : i32, i32, i32
  }
}

</mosaic_0001>

<llo_original>
// kernel: tpu_custom_call.1
$region0: #{tpu_custom_call.1}
  #allocation0 [shape = 'u32[]', space=smem, size = 0x4, offset = 0x4, fixed_abs, tag = 'smem constant byte address 0x4 - core index']
  #allocation1 [shape = 'u32[144,128]{1,0:T(1,128)}', space=vmem, size = 0x12000, scoped, tag = 'internal scratch']
  %s0 = inlined_call_operand.hbm [shape: f32[8,128], index: 0, kind: input, shape index: {}]
  %s1 = inlined_call_operand.hbm [shape: bf16[128,512], index: 1, kind: input, shape index: {}]
  %s2 = inlined_call_operand.vmem [shape: f32[1,512], index: 2, kind: input, shape index: {}]
  %s3 = inlined_call_operand.hbm [shape: f32[4,8,128], index: 3, kind: output, shape index: {}]
  %s4 = sld [smem:[#allocation0]]
  $region30: #{tpu_custom_call.1} parent=0
    _
  %s6 = ssub.s32 1, %s4
  %s7 = scalar_select 0, %s6, %s4
  $region1: #{tpu_custom_call.1} parent=0
    #allocation2 [shape = 'u8[4096]{0}', space=vmem, size = 0x1000, scoped, tag = 'input window, operand 0, single buffered']
    #allocation3 [shape = 's32[1]{0}', space=sflag, size = 0x4, scoped, tag = 'scoped memory for tpu_custom_call.1']
    #allocation4 [shape = 's32[1]{0}', space=sflag, size = 0x4, scoped, tag = 'scoped memory for tpu_custom_call.1']
    #allocation5 [shape = 'u8[131072]{0}', space=vmem, size = 0x20000, scoped, tag = 'input window, operand 1, single buffered']
    #allocation6 [shape = 's32[1]{0}', space=sflag, size = 0x4, scoped, tag = 'scoped memory for tpu_custom_call.1']
    #allocation7 [shape = 'u8[16384]{0}', space=vmem, size = 0x4000, scoped, tag = 'output window, operand 0, single buffered']
    %8 = vsyncpa [#allocation3], 0
    %9 = vsyncpa [#allocation6], 0
    %10 = vsyncpa [#allocation4], 0
    // Predicated region
    $region2: #{tpu_custom_call.1} parent=1 // pred_check
      _
    $region3: #{tpu_custom_call.1} parent=1 // pred_check_branch
      %12 = sbr.rel (0) target = $region5
    $region4: #{tpu_custom_call.1} parent=1 // pred_region
      %s14 = ssub.s32 128, 128
      %15 = vsyncadd [#allocation3], %s14
      %s17 = sshll.u32 [#allocation2], 4
      %s18 = int_to_ptr.vmem [resolvable:$true] %s17
      %20 = dma.hbm_to_vmem [thread:$0]  %s0, 128, %s18, [#allocation3]
    $region5: #{tpu_custom_call.1} parent=1 // pred_fallthru
      _
    // Predicated region
    $region6: #{tpu_custom_call.1} parent=1 // pred_check
      _
    $region7: #{tpu_custom_call.1} parent=1 // pred_check_branch
      %22 = sbr.rel (0) target = $region9
    $region8: #{tpu_custom_call.1} parent=1 // pred_region
      %s24 = ssub.s32 4096, 4096
      %25 = vsyncadd [#allocation6], %s24
      %s26 = sshll.u32 [#allocation5], 4
      %s27 = int_to_ptr.vmem [resolvable:$true] %s26
      %32 = dma.hbm_to_vmem [thread:$0]  %s1, 4096, %s27, [#allocation6], 256, 256, 16
    $region9: #{tpu_custom_call.1} parent=1 // pred_fallthru
      _
    // Predicated region
    $region10: #{tpu_custom_call.1} parent=1 // pred_check
      _
    $region11: #{tpu_custom_call.1} parent=1 // pred_check_branch
      %34 = sbr.rel (0) target = $region13
    $region12: #{tpu_custom_call.1} parent=1 // pred_region
      _
    $region13: #{tpu_custom_call.1} parent=1 // pred_fallthru
      _
    // Predicated region
    $region14: #{tpu_custom_call.1} parent=1 // pred_check
      _
    $region15: #{tpu_custom_call.1} parent=1 // pred_check_branch
      %36 = sbr.rel (0) target = $region17
    $region16: #{tpu_custom_call.1} parent=1 // pred_region
      %37 = dma.done [#allocation3], 128
    $region17: #{tpu_custom_call.1} parent=1 // pred_fallthru
      _
    // Predicated region
    $region18: #{tpu_custom_call.1} parent=1 // pred_check
      _
    $region19: #{tpu_custom_call.1} parent=1 // pred_check_branch
      %39 = sbr.rel (0) target = $region21
    $region20: #{tpu_custom_call.1} parent=1 // pred_region
      %40 = dma.done [#allocation6], 4096
    $region21: #{tpu_custom_call.1} parent=1 // pred_fallthru
      _
    %v42 = vld [vmem:[#allocation2] sm:$0xff]
    %v43 = vxor.u32 %v42, 2147483648
    %v44 = vmul.f32 %v43, 1.442695
    %v45 = vpow.pop %v44
    %v46 = vadd.f32 %v45, 1.0
    %v47 = vrcp.pop %v46
    %v48 = vmul.f32 1.0, %v47
    %v49 = vmul.f32 %v42, %v48
    %v50 = vpack.c.bf16 %v49, %v49
    %v51 = vld [vmem:[#allocation5] sm:$0xff]
    %v52 = vld [vmem:[#allocation5 + $0x8] sm:$0xff]
    %v53 = vld [vmem:[#allocation5 + $0x10] sm:$0xff]
    %v54 = vld [vmem:[#allocation5 + $0x18] sm:$0xff]
    %v55 = vld [vmem:[#allocation5 + $0x20] sm:$0xff]
    %v56 = vld [vmem:[#allocation5 + $0x28] sm:$0xff]
    %v57 = vld [vmem:[#allocation5 + $0x30] sm:$0xff]
    %v58 = vld [vmem:[#allocation5 + $0x38] sm:$0xff]
    %v59 = vld [vmem:[#allocation5 + $0x40] sm:$0xff]
    %v60 = vld [vmem:[#allocation5 + $0x48] sm:$0xff]
    %v61 = vld [vmem:[#allocation5 + $0x50] sm:$0xff]
    %v62 = vld [vmem:[#allocation5 + $0x58] sm:$0xff]
    %v63 = vld [vmem:[#allocation5 + $0x60] sm:$0xff]
    %v64 = vld [vmem:[#allocation5 + $0x68] sm:$0xff]
    %v65 = vld [vmem:[#allocation5 + $0x70] sm:$0xff]
    %v66 = vld [vmem:[#allocation5 + $0x78] sm:$0xff]
    %v67 = vld [vmem:[#allocation5 + $0x80] sm:$0xff]
    %v68 = vld [vmem:[#allocation5 + $0x88] sm:$0xff]
    %v69 = vld [vmem:[#allocation5 + $0x90] sm:$0xff]
    %v70 = vld [vmem:[#allocation5 + $0x98] sm:$0xff]
    %v71 = vld [vmem:[#allocation5 + $0xa0] sm:$0xff]
    %v72 = vld [vmem:[#allocation5 + $0xa8] sm:$0xff]
    %v73 = vld [vmem:[#allocation5 + $0xb0] sm:$0xff]
    %v74 = vld [vmem:[#allocation5 + $0xb8] sm:$0xff]
    %v75 = vld [vmem:[#allocation5 + $0xc0] sm:$0xff]
    %v76 = vld [vmem:[#allocation5 + $0xc8] sm:$0xff]
    %v77 = vld [vmem:[#allocation5 + $0xd0] sm:$0xff]
    %v78 = vld [vmem:[#allocation5 + $0xd8] sm:$0xff]
    %v79 = vld [vmem:[#allocation5 + $0xe0] sm:$0xff]
    %v80 = vld [vmem:[#allocation5 + $0xe8] sm:$0xff]
    %v81 = vld [vmem:[#allocation5 + $0xf0] sm:$0xff]
    %v82 = vld [vmem:[#allocation5 + $0xf8] sm:$0xff]
    %v83 = vld [vmem:[%s2] sm:$0xf]
    %v85 = vlaneseq
    %v86 = vshrl.u32 %v85, 7
    %v87 = vsub.s32 0, %v86
    %v88 = vrot.slane %v83, %v87
    %v89 = vlaneseq
    %v90 = vshrl.u32 %v89, 7
    %v91 = vsub.s32 1, %v90
    %v92 = vrot.slane %v83, %v91
    %v93 = vlaneseq
    %v94 = vshrl.u32 %v93, 7
    %v95 = vsub.s32 2, %v94
    %v96 = vrot.slane %v83, %v95
    %v97 = vlaneseq
    %v98 = vshrl.u32 %v97, 7
    %v99 = vsub.s32 3, %v98
    %v100 = vrot.slane %v83, %v99
    %v137 = vunpack.c.l.b16 %v51
    %v138 = vunpack.c.h.b16 %v51
    %v139 = vunpack.c.l.b16 %v52
    %v140 = vunpack.c.h.b16 %v52
    %v141 = vunpack.c.l.b16 %v53
    %v142 = vunpack.c.h.b16 %v53
    %v143 = vunpack.c.l.b16 %v54
    %v144 = vunpack.c.h.b16 %v54
    %v145 = vunpack.c.l.b16 %v55
    %v146 = vunpack.c.h.b16 %v55
    %v147 = vunpack.c.l.b16 %v56
    %v148 = vunpack.c.h.b16 %v56
    %v149 = vunpack.c.l.b16 %v57
    %v150 = vunpack.c.h.b16 %v57
    %v151 = vunpack.c.l.b16 %v58
    %v152 = vunpack.c.h.b16 %v58
    %v153 = vunpack.c.l.b16 %v59
    %v154 = vunpack.c.h.b16 %v59
    %v155 = vunpack.c.l.b16 %v60
    %v156 = vunpack.c.h.b16 %v60
    %v157 = vunpack.c.l.b16 %v61
    %v158 = vunpack.c.h.b16 %v61
    %v159 = vunpack.c.l.b16 %v62
    %v160 = vunpack.c.h.b16 %v62
    %v161 = vunpack.c.l.b16 %v63
    %v162 = vunpack.c.h.b16 %v63
    %v163 = vunpack.c.l.b16 %v64
    %v164 = vunpack.c.h.b16 %v64
    %v165 = vunpack.c.l.b16 %v65
    %v166 = vunpack.c.h.b16 %v65
    %v167 = vunpack.c.l.b16 %v66
    %v168 = vunpack.c.h.b16 %v66
    %v169 = vunpack.c.l.b16 %v67
    %v170 = vunpack.c.h.b16 %v67
    %v171 = vunpack.c.l.b16 %v68
    %v172 = vunpack.c.h.b16 %v68
    %v173 = vunpack.c.l.b16 %v69
    %v174 = vunpack.c.h.b16 %v69
    %v175 = vunpack.c.l.b16 %v70
    %v176 = vunpack.c.h.b16 %v70
    %v177 = vunpack.c.l.b16 %v71
    %v178 = vunpack.c.h.b16 %v71
    %v179 = vunpack.c.l.b16 %v72
    %v180 = vunpack.c.h.b16 %v72
    %v181 = vunpack.c.l.b16 %v73
    %v182 = vunpack.c.h.b16 %v73
    %v183 = vunpack.c.l.b16 %v74
    %v184 = vunpack.c.h.b16 %v74
    %v185 = vunpack.c.l.b16 %v75
    %v186 = vunpack.c.h.b16 %v75
    %v187 = vunpack.c.l.b16 %v76
    %v188 = vunpack.c.h.b16 %v76
    %v189 = vunpack.c.l.b16 %v77
    %v190 = vunpack.c.h.b16 %v77
    %v191 = vunpack.c.l.b16 %v78
    %v192 = vunpack.c.h.b16 %v78
    %v193 = vunpack.c.l.b16 %v79
    %v194 = vunpack.c.h.b16 %v79
    %v195 = vunpack.c.l.b16 %v80
    %v196 = vunpack.c.h.b16 %v80
    %v197 = vunpack.c.l.b16 %v81
    %v198 = vunpack.c.h.b16 %v81
    %v199 = vunpack.c.l.b16 %v82
    %v200 = vunpack.c.h.b16 %v82
    %v201 = vpack.c.b16 %v141, %v137
    %v202 = vpack.c.b16 %v142, %v138
    %v203 = vpack.c.b16 %v143, %v139
    %v204 = vpack.c.b16 %v144, %v140
    %v205 = vpack.c.b16 %v149, %v145
    %v206 = vpack.c.b16 %v150, %v146
    %v207 = vpack.c.b16 %v151, %v147
    %v208 = vpack.c.b16 %v152, %v148
    %v209 = vpack.c.b16 %v157, %v153
    %v210 = vpack.c.b16 %v158, %v154
    %v211 = vpack.c.b16 %v159, %v155
    %v212 = vpack.c.b16 %v160, %v156
    %v213 = vpack.c.b16 %v165, %v161
    %v214 = vpack.c.b16 %v166, %v162
    %v215 = vpack.c.b16 %v167, %v163
    %v216 = vpack.c.b16 %v168, %v164
    %v217 = vpack.c.b16 %v173, %v169
    %v218 = vpack.c.b16 %v174, %v170
    %v219 = vpack.c.b16 %v175, %v171
    %v220 = vpack.c.b16 %v176, %v172
    %v221 = vpack.c.b16 %v181, %v177
    %v222 = vpack.c.b16 %v182, %v178
    %v223 = vpack.c.b16 %v183, %v179
    %v224 = vpack.c.b16 %v184, %v180
    %v225 = vpack.c.b16 %v189, %v185
    %v226 = vpack.c.b16 %v190, %v186
    %v227 = vpack.c.b16 %v191, %v187
    %v228 = vpack.c.b16 %v192, %v188
    %v229 = vpack.c.b16 %v197, %v193
    %v230 = vpack.c.b16 %v198, %v194
    %v231 = vpack.c.b16 %v199, %v195
    %v232 = vpack.c.b16 %v200, %v196
    %265 = vmatprep.subr.bf16.mxu0 %v202
    %266 = vmatpush1.bf16.msra.mxu0 %v201
    %267 = vmatprep.subr.bf16.mxu0 %v206
    %268 = vmatpush1.bf16.msra.mxu0 %v205
    %269 = vmatprep.subr.bf16.mxu0 %v210
    %270 = vmatpush1.bf16.msra.mxu0 %v209
    %271 = vmatprep.subr.bf16.mxu0 %v214
    %272 = vmatpush1.bf16.msra.mxu0 %v213
    %273 = vmatprep.subr.bf16.mxu0 %v218
    %274 = vmatpush1.bf16.msra.mxu0 %v217
    %275 = vmatprep.subr.bf16.mxu0 %v222
    %276 = vmatpush1.bf16.msra.mxu0 %v221
    %277 = vmatprep.subr.bf16.mxu0 %v226
    %278 = vmatpush1.bf16.msra.mxu0 %v225
    %279 = vmatprep.subr.bf16.mxu0 %v230
    %280 = vmatpush1.bf16.msra.mxu0 %v229
    %281 = vmatprep.subr.bf16.mxu0 0
    %282 = vmatpush1.bf16.msra.mxu0 0
    %283 = vmatprep.subr.bf16.mxu0 0
    %284 = vmatpush1.bf16.msra.mxu0 0
    %285 = vmatprep.subr.bf16.mxu0 0
    %286 = vmatpush1.bf16.msra.mxu0 0
    %287 = vmatprep.subr.bf16.mxu0 0
    %288 = vmatpush1.bf16.msra.mxu0 0
    %289 = vmatprep.subr.bf16.mxu0 0
    %290 = vmatpush1.bf16.msra.mxu0 0
    %291 = vmatprep.subr.bf16.mxu0 0
    %292 = vmatpush1.bf16.msra.mxu0 0
    %293 = vmatprep.subr.bf16.mxu0 0
    %294 = vmatpush1.bf16.msra.mxu0 0
    %295 = vmatprep.subr.bf16.mxu0 0
    %296 = vmatpush1.bf16.msra.mxu0 0
    %297 = vmatprep.mubr.bf16.mxu0 0
    %298 = vmatmul.mubr.bf16.gmra.mrb[0].mxu0 %v50
    %v299 = vpop.f32.mrb[0].mxu0
    %v300 = vadd.f32 %v88, %v299
    %v301 = vpop.f32.mrb[0].mxu0
    %v302 = vadd.f32 %v92, %v301
    %v303 = vpop.f32.mrb[0].mxu0
    %v304 = vpop.f32.mrb[0].mxu0
    %305 = vdwg.mxu0
    %306 = vmatprep.subr.bf16.mxu0 %v204
    %307 = vmatpush1.bf16.msra.mxu0 %v203
    %308 = vmatprep.subr.bf16.mxu0 %v208
    %309 = vmatpush1.bf16.msra.mxu0 %v207
    %310 = vmatprep.subr.bf16.mxu0 %v212
    %311 = vmatpush1.bf16.msra.mxu0 %v211
    %312 = vmatprep.subr.bf16.mxu0 %v216
    %313 = vmatpush1.bf16.msra.mxu0 %v215
    %314 = vmatprep.subr.bf16.mxu0 %v220
    %315 = vmatpush1.bf16.msra.mxu0 %v219
    %316 = vmatprep.subr.bf16.mxu0 %v224
    %317 = vmatpush1.bf16.msra.mxu0 %v223
    %318 = vmatprep.subr.bf16.mxu0 %v228
    %319 = vmatpush1.bf16.msra.mxu0 %v227
    %320 = vmatprep.subr.bf16.mxu0 %v232
    %321 = vmatpush1.bf16.msra.mxu0 %v231
    %322 = vmatprep.subr.bf16.mxu0 0
    %323 = vmatpush1.bf16.msra.mxu0 0
    %324 = vmatprep.subr.bf16.mxu0 0
    %325 = vmatpush1.bf16.msra.mxu0 0
    %326 = vmatprep.subr.bf16.mxu0 0
    %327 = vmatpush1.bf16.msra.mxu0 0
    %328 = vmatprep.subr.bf16.mxu0 0
    %329 = vmatpush1.bf16.msra.mxu0 0
    %330 = vmatprep.subr.bf16.mxu0 0
    %331 = vmatpush1.bf16.msra.mxu0 0
    %332 = vmatprep.subr.bf16.mxu0 0
    %333 = vmatpush1.bf16.msra.mxu0 0
    %334 = vmatprep.subr.bf16.mxu0 0
    %335 = vmatpush1.bf16.msra.mxu0 0
    %336 = vmatprep.subr.bf16.mxu0 0
    %337 = vmatpush1.bf16.msra.mxu0 0
    %338 = vmatprep.mubr.bf16.mxu0 0
    %339 = vmatmul.mubr.bf16.gmra.mrb[0].mxu0 %v50
    %v340 = vpop.f32.mrb[0].mxu0
    %v341 = vadd.f32 %v96, %v340
    %v342 = vpop.f32.mrb[0].mxu0
    %v343 = vadd.f32 %v100, %v342
    %v344 = vpop.f32.mrb[0].mxu0
    %v345 = vpop.f32.mrb[0].mxu0
    %346 = vdwg.mxu0
    %347 = vst [vmem:[#allocation7] sm:$0xff] %v300
    %s348 = scalar_lea.vmem [#allocation7], 8
    %349 = vst [vmem:[%s348] sm:$0xff] %v302
    %s350 = scalar_lea.vmem [#allocation7], 16
    %351 = vst [vmem:[%s350] sm:$0xff] %v341
    %s352 = scalar_lea.vmem [#allocation7], 24
    %353 = vst [vmem:[%s352] sm:$0xff] %v343
    // Predicated region
    $region22: #{tpu_custom_call.1} parent=1 // pred_check
      _
    $region23: #{tpu_custom_call.1} parent=1 // pred_check_branch
      %355 = sbr.rel (0) target = $region25
    $region24: #{tpu_custom_call.1} parent=1 // pred_region
      %s357 = ssub.s32 512, 512
      %358 = vsyncadd [#allocation4], %s357
      %s359 = sshll.u32 [#allocation7], 4
      %s360 = int_to_ptr.vmem [resolvable:$true] %s359
      %365 = dma.vmem_to_hbm [thread:$0]  %s360, 512, %s3, [#allocation4], 128, 128, 8
    $region25: #{tpu_custom_call.1} parent=1 // pred_fallthru
      _
    // Predicated region
    $region26: #{tpu_custom_call.1} parent=1 // pred_check
      _
    $region27: #{tpu_custom_call.1} parent=1 // pred_check_branch
      %367 = sbr.rel (0) target = $region29
    $region28: #{tpu_custom_call.1} parent=1 // pred_region
      %368 = dma.done [#allocation4], 512
    $region29: #{tpu_custom_call.1} parent=1 // pred_fallthru
      _
    %369 = vsyncpa [#allocation3], 1
    %370 = vsyncpa [#allocation6], 1
    %371 = vsyncpa [#allocation4], 1

</llo_original>
